<compile_context>
chip_gen: v7x
topology: tpu7x:2x2x1
jax: 0.10.0
libtpu: 0.0.40
codegen_flags: <defaults>
</compile_context>

<pallas_src>
import functools

import jax
import jax.numpy as jnp
from jax.experimental import pallas as pl
from jax.experimental.pallas import tpu as pltpu


def _round_up(x, m):
    return (x + m - 1) // m * m


def _sa_kernel(n_layers, tn, steps_per_split, n_real, mask_pad, x_ref, *refs):
    """One (split s, batch b, point-tile n) grid step.

    refs = (w_0, shift_0, ..., w_{L-1}, shift_{L-1}, out_ref)
      x_ref:   [c_in, tn]            bf16 channels-major point-feature tile
      w_l:     [C_l_pad, C_prev_pad] bf16 conv weight with BN scale folded in
      shift_l: [C_l_pad, 1]          f32 conv bias + BN shift folded in
      out_ref: [C_last_pad, 1]       f32 running channel-max (resident over n)
    """
    out_ref = refs[-1]
    n = pl.program_id(2)

    # ReLU guarantees activations >= 0, so 0 is a valid identity for max.
    @pl.when(n == 0)
    def _():
        out_ref[...] = jnp.zeros_like(out_ref)

    h = x_ref[...]                                              # bf16 [c_in, tn]
    for l in range(n_layers):
        w = refs[2 * l][...]                                    # bf16 [C_l_pad, C_prev_pad]
        shift = refs[2 * l + 1][...]                            # f32  [C_l_pad, 1]
        h = jnp.dot(w, h, preferred_element_type=jnp.float32) + shift
        h = jnp.maximum(h, 0.0)                                 # ReLU (f32)
        if l + 1 < n_layers:
            h = h.astype(jnp.bfloat16)                          # bf16 between layers

    if mask_pad:
        # Only tiles that contain padded point columns pay for the mask.
        step = pl.program_id(0) * steps_per_split + n
        tile_end = (step + 1) * tn

        @pl.when(tile_end > n_real)
        def _():
            col = step * tn + jax.lax.broadcasted_iota(jnp.int32, h.shape, 1)
            hm = jnp.where(col < n_real, h, 0.0)
            out_ref[...] = jnp.maximum(out_ref[...],
                                       jnp.max(hm, axis=1, keepdims=True))

        @pl.when(tile_end <= n_real)
        def _():
            out_ref[...] = jnp.maximum(out_ref[...],
                                       jnp.max(h, axis=1, keepdims=True))
    else:
        out_ref[...] = jnp.maximum(out_ref[...],
                                   jnp.max(h, axis=1, keepdims=True))


def pointnet_set_abstraction(xyz, points, params, eps=1e-5):
    """xyz: [B, N, 3]; points: [B, N, D] or None.

    params: list of (conv_w [C_out, C_prev], conv_b [C_out],
                     bn_gamma, bn_beta, bn_running_mean, bn_running_var).

    Returns (new_xyz [B, 3, 1], new_points [B, C_last, 1]) matching the
    PyTorch module outputs.
    """
    B, N, C = xyz.shape
    if points is not None:
        x = jnp.concatenate([xyz, points], axis=-1)             # [B, N, C+D]
    else:
        x = xyz
    c_in = x.shape[-1]
    # Channels-major bf16: points on the lane axis (lane-dense), halves the
    # dominant HBM stream and the x VMEM tile.
    x = jnp.transpose(x, (0, 2, 1)).astype(jnp.bfloat16)        # [B, c_in, N]

    # ---- fold conv bias + eval-mode BatchNorm into (bf16 W, f32 shift);
    # pad every layer's output channels to a multiple of 128 (lane-dense MXU).
    # TODO(synk): train-mode BatchNorm (batch statistics) is not reproduced;
    # eval-mode (running stats) semantics are used instead.
    folded = []
    c_prev, c_prev_pad = c_in, c_in
    for (w, b, gamma, beta, rmean, rvar) in params:
        c_out = w.shape[0]
        c_out_pad = _round_up(c_out, 128)
        scale = gamma / jnp.sqrt(rvar + eps)                    # [c_out]
        w_f = w * scale[:, None]                                # [c_out, c_prev]
        shift = (b - rmean) * scale + beta                      # [c_out]
        w_p = jnp.zeros((c_out_pad, c_prev_pad), jnp.float32)
        w_p = w_p.at[:c_out, :c_prev].set(w_f)
        s_p = jnp.zeros((c_out_pad, 1), jnp.float32)
        s_p = s_p.at[:c_out, 0].set(shift)
        folded.append((w_p.astype(jnp.bfloat16), s_p))
        c_prev, c_prev_pad = c_out, c_out_pad
    n_layers = len(folded)
    c_last, c_last_pad = c_prev, c_prev_pad
    c_max_pad = max(max(w.shape[0] for w, _ in folded), _round_up(c_in, 8))

    # ---- point-tile selection: biggest tile that fits a conservative budget
    # (40 MiB keeps headroom even on v7x's 64 MiB VMEM).
    def vmem_bytes(t):
        x_buf = 2 * c_in * t * 2                                # 2x bf16 x tile
        w_buf = sum(2 * (w.size * 2 + s.size * 4) for w, s in folded)
        inter = 3 * t * c_max_pad * 4                           # working activations
        return x_buf + w_buf + inter + 2 * c_last_pad * 4

    budget = 40 * 1024 * 1024
    n_pad128 = _round_up(N, 128)
    tn = 128
    for cand in (1024, 512, 256, 128):
        if vmem_bytes(cand) <= budget:
            tn = cand
            break
    tn = min(tn, n_pad128)

    # ---- v7x: when B == 1, split the point axis into 2 independent partial
    # maxes so both TensorCores get work (no-op on single-core v5e/v6e; the
    # partials are combined with jnp.max in the wrapper).
    n_split = 1
    if B == 1:
        while tn > 128 and _round_up(N, tn) // tn < 2:
            tn //= 2
        if _round_up(N, tn) // tn >= 2:
            n_split = 2

    n_pad = _round_up(N, tn * n_split)
    if n_pad != N:
        x = jnp.pad(x, ((0, 0), (0, 0), (0, n_pad - N)))
    steps_total = n_pad // tn
    steps_per_split = steps_total // n_split
    mask_pad = (n_pad != N)

    in_specs = [pl.BlockSpec((None, c_in, tn),
                             lambda s, b, n: (b, 0, s * steps_per_split + n))]
    operands = [x]
    flops = 0
    bytes_accessed = x.size * 2
    for (w_p, s_p) in folded:
        in_specs.append(pl.BlockSpec(w_p.shape, lambda s, b, n: (0, 0)))
        in_specs.append(pl.BlockSpec(s_p.shape, lambda s, b, n: (0, 0)))
        operands += [w_p, s_p]
        flops += 2 * B * n_pad * w_p.shape[0] * w_p.shape[1]
        bytes_accessed += w_p.size * 2 + s_p.size * 4
    bytes_accessed += n_split * B * c_last_pad * 4

    out = pl.pallas_call(
        functools.partial(_sa_kernel, n_layers, tn, steps_per_split, N, mask_pad),
        grid=(n_split, B, steps_per_split),
        in_specs=in_specs,
        out_specs=pl.BlockSpec((None, None, c_last_pad, 1),
                               lambda s, b, n: (s, b, 0, 0)),
        out_shape=jax.ShapeDtypeStruct((n_split, B, c_last_pad, 1), jnp.float32),
        compiler_params=pltpu.CompilerParams(
            dimension_semantics=("parallel", "parallel", "arbitrary"),
            vmem_limit_bytes=48 * 1024 * 1024),
        cost_estimate=pl.CostEstimate(
            flops=int(flops), transcendentals=0,
            bytes_accessed=int(bytes_accessed)),
    )(*operands)

    # Combine split partials (ReLU >= 0 makes the 0-initialized partial safe).
    out = jnp.max(out, axis=0)                                  # [B, c_last_pad, 1]
    new_points = out[:, :c_last, :]                             # [B, C_last, 1]
    new_xyz = jnp.zeros((B, C, 1), dtype=xyz.dtype)             # zeros, as in torch
    return new_xyz, new_points


def _ref_forward(xyz, points, params, eps=1e-5):
    """Pure-JAX reference matching the PyTorch forward (eval-mode BN, f32)."""
    x = jnp.concatenate([xyz, points], axis=-1)                 # [B, N, C_in]
    h = x.astype(jnp.float32)
    for (w, b, gamma, beta, rmean, rvar) in params:
        h = jnp.einsum("bnc,oc->bno", h, w) + b                 # 1x1 conv
        h = gamma * (h - rmean) / jnp.sqrt(rvar + eps) + beta
        h = jnp.maximum(h, 0.0)
    new_points = jnp.max(h, axis=1)[:, :, None]                 # [B, C_last, 1]
    new_xyz = jnp.zeros((xyz.shape[0], xyz.shape[2], 1), xyz.dtype)
    return new_xyz, new_points


def init_params(key, in_channel, mlp):
    """Deterministic parameter init (Conv2d kaiming-uniform-ish + BN stats)."""
    params = []
    last = in_channel
    for out_ch in mlp:
        key, k1, k2, k3, k4, k5, k6 = jax.random.split(key, 7)
        bound = 1.0 / float(last) ** 0.5
        w = jax.random.uniform(k1, (out_ch, last), jnp.float32, -bound, bound)
        b = jax.random.uniform(k2, (out_ch,), jnp.float32, -bound, bound)
        gamma = jax.random.uniform(k3, (out_ch,), jnp.float32, 0.5, 1.5)
        beta = jax.random.uniform(k4, (out_ch,), jnp.float32, -0.5, 0.5)
        rmean = jax.random.uniform(k5, (out_ch,), jnp.float32, -0.5, 0.5)
        rvar = jax.random.uniform(k6, (out_ch,), jnp.float32, 0.5, 1.5)
        params.append((w, b, gamma, beta, rmean, rvar))
        last = out_ch
    return params


if __name__ == "__main__":
    key = jax.random.PRNGKey(0)

    # Case 1: B=2, N=200 — exercises padded-column masking in a single tile.
    k_xyz, k_pts, k_par, key = jax.random.split(key, 4)
    B, N, C, D = 2, 200, 3, 5                    # xyz coords C=3, features D=5
    in_channel = C + D                           # 8
    mlp = [32, 64]

    xyz = jax.random.normal(k_xyz, (B, N, C), jnp.float32)
    points = jax.random.normal(k_pts, (B, N, D), jnp.float32)
    params = init_params(k_par, in_channel, mlp)

    new_xyz, new_points = pointnet_set_abstraction(xyz, points, params)
    jax.block_until_ready(new_points)
    jax.block_until_ready(new_xyz)

    ref_xyz, ref_points = _ref_forward(xyz, points, params)
    assert new_points.shape == (B, mlp[-1], 1)
    assert new_xyz.shape == (B, C, 1)
    # bf16 inputs / inter-layer activations (f32 MXU accumulation).
    assert jnp.allclose(new_points, ref_points, atol=3e-2, rtol=3e-2)
    assert jnp.allclose(new_xyz, ref_xyz)

    # Case 2: B=1, N=1000 — exercises the 2-way point split (v7x dual-TC path).
    k_xyz2, k_pts2, k_par2, key = jax.random.split(key, 4)
    B2, N2 = 1, 1000
    xyz2 = jax.random.normal(k_xyz2, (B2, N2, C), jnp.float32)
    points2 = jax.random.normal(k_pts2, (B2, N2, D), jnp.float32)
    params2 = init_params(k_par2, in_channel, mlp)

    new_xyz2, new_points2 = pointnet_set_abstraction(xyz2, points2, params2)
    jax.block_until_ready(new_points2)
    ref_xyz2, ref_points2 = _ref_forward(xyz2, points2, params2)
    assert new_points2.shape == (B2, mlp[-1], 1)
    assert jnp.allclose(new_points2, ref_points2, atol=3e-2, rtol=3e-2)
    assert jnp.allclose(new_xyz2, ref_xyz2)

    print("KERNEL_OK")
</pallas_src>

<mosaic_0001>
module attributes {stable_mosaic.version = 11 : i64} {
  func.func @_sa_kernel(%arg0: i32, %arg1: i32, %arg2: i32, %arg3: memref<1x8x256xbf16, #tpu.memory_space<vmem>>, %arg4: memref<128x8xbf16, #tpu.memory_space<vmem>>, %arg5: memref<128x1xf32, #tpu.memory_space<vmem>>, %arg6: memref<128x128xbf16, #tpu.memory_space<vmem>>, %arg7: memref<128x1xf32, #tpu.memory_space<vmem>>, %arg8: memref<1x1x128x1xf32, #tpu.memory_space<vmem>>) attributes {dimension_semantics = [#tpu.dimension_semantics<parallel>, #tpu.dimension_semantics<parallel>, #tpu.dimension_semantics<arbitrary>], iteration_bounds = array<i64: 1, 2, 1>, scalar_prefetch = 0 : i64, scratch_operands = 0 : i64, tpu.core_type = #tpu.core_type<tc>, window_params = [{transform_indices = @transform_0, window_bounds = array<i64: 1, 8, 256>}, {pipeline_mode = #tpu.pipeline_mode<synchronous>, transform_indices = @transform_1, window_bounds = array<i64: 128, 8>}, {pipeline_mode = #tpu.pipeline_mode<synchronous>, transform_indices = @transform_2, window_bounds = array<i64: 128, 1>}, {pipeline_mode = #tpu.pipeline_mode<synchronous>, transform_indices = @transform_3, window_bounds = array<i64: 128, 128>}, {pipeline_mode = #tpu.pipeline_mode<synchronous>, transform_indices = @transform_4, window_bounds = array<i64: 128, 1>}, {transform_indices = @transform_5, window_bounds = array<i64: 1, 1, 128, 1>}]} {
    %c0_i32 = arith.constant 0 : i32
    %0 = arith.cmpi eq, %arg2, %c0_i32 : i32
    %1 = arith.extui %0 : i1 to i32
    %c0_i32_0 = arith.constant 0 : i32
    %2 = arith.cmpi ne, %1, %c0_i32_0 : i32
    scf.if %2 {
      %cst_18 = arith.constant 0.000000e+00 : f32
      %30 = vector.broadcast %cst_18 : f32 to vector<128x1xf32>
      %c0_19 = arith.constant 0 : index
      %c0_20 = arith.constant 0 : index
      %c0_21 = arith.constant 0 : index
      %c0_22 = arith.constant 0 : index
      %31 = vector.load %arg8[%c0_19, %c0_20, %c0_21, %c0_22] : memref<1x1x128x1xf32, #tpu.memory_space<vmem>>, vector<1x1x128x1xf32>
      %32 = vector.shape_cast %31 : vector<1x1x128x1xf32> to vector<128x1xf32>
      %33 = vector.shape_cast %30 : vector<128x1xf32> to vector<1x1x128x1xf32>
      tpu.vector_store %arg8[%c0_19, %c0_20, %c0_21, %c0_22], %33 {strides = array<i32>} : memref<1x1x128x1xf32, #tpu.memory_space<vmem>>, vector<1x1x128x1xf32>,
    } else {
    }
    %c0 = arith.constant 0 : index
    %c0_1 = arith.constant 0 : index
    %c0_2 = arith.constant 0 : index
    %3 = vector.load %arg3[%c0, %c0_1, %c0_2] : memref<1x8x256xbf16, #tpu.memory_space<vmem>>, vector<1x8x256xbf16>
    %4 = vector.shape_cast %3 : vector<1x8x256xbf16> to vector<8x256xbf16>
    %c0_3 = arith.constant 0 : index
    %c0_4 = arith.constant 0 : index
    %5 = vector.load %arg4[%c0_3, %c0_4] : memref<128x8xbf16, #tpu.memory_space<vmem>>, vector<128x8xbf16>
    %c0_5 = arith.constant 0 : index
    %c0_6 = arith.constant 0 : index
    %6 = vector.load %arg5[%c0_5, %c0_6] : memref<128x1xf32, #tpu.memory_space<vmem>>, vector<128x1xf32>
    %cst = arith.constant dense<0.000000e+00> : vector<128x256xf32>
    %7 = tpu.matmul %5, %4, %cst {dimension_numbers = #tpu.dot_dimension_numbers<[1], [0], [0], [1], [0, 0, 1, 1], [], []>} : vector<128x8xbf16>, vector<8x256xbf16>, vector<128x256xf32> -> vector<128x256xf32>
    %8 = vector.broadcast %6 : vector<128x1xf32> to vector<128x256xf32>
    %9 = arith.addf %7, %8 : vector<128x256xf32>
    %cst_7 = arith.constant 0.000000e+00 : f32
    %10 = vector.broadcast %cst_7 : f32 to vector<128x256xf32>
    %11 = arith.maximumf %9, %10 : vector<128x256xf32>
    %12 = arith.truncf %11 : vector<128x256xf32> to vector<128x256xbf16>
    %c0_8 = arith.constant 0 : index
    %c0_9 = arith.constant 0 : index
    %13 = vector.load %arg6[%c0_8, %c0_9] : memref<128x128xbf16, #tpu.memory_space<vmem>>, vector<128x128xbf16>
    %c0_10 = arith.constant 0 : index
    %c0_11 = arith.constant 0 : index
    %14 = vector.load %arg7[%c0_10, %c0_11] : memref<128x1xf32, #tpu.memory_space<vmem>>, vector<128x1xf32>
    %cst_12 = arith.constant dense<0.000000e+00> : vector<128x256xf32>
    %15 = tpu.matmul %13, %12, %cst_12 {dimension_numbers = #tpu.dot_dimension_numbers<[1], [0], [0], [1], [0, 0, 1, 1], [], []>} : vector<128x128xbf16>, vector<128x256xbf16>, vector<128x256xf32> -> vector<128x256xf32>
    %16 = vector.broadcast %14 : vector<128x1xf32> to vector<128x256xf32>
    %17 = arith.addf %15, %16 : vector<128x256xf32>
    %cst_13 = arith.constant 0.000000e+00 : f32
    %18 = vector.broadcast %cst_13 : f32 to vector<128x256xf32>
    %19 = arith.maximumf %17, %18 : vector<128x256xf32>
    %c1_i32 = arith.constant 1 : i32
    %20 = arith.muli %arg0, %c1_i32 : i32
    %21 = arith.addi %20, %arg2 : i32
    %c1_i32_14 = arith.constant 1 : i32
    %22 = arith.addi %21, %c1_i32_14 : i32
    %c256_i32 = arith.constant 256 : i32
    %23 = arith.muli %22, %c256_i32 : i32
    %c200_i32 = arith.constant 200 : i32
    %24 = arith.cmpi sgt, %23, %c200_i32 : i32
    %25 = arith.extui %24 : i1 to i32
    %c0_i32_15 = arith.constant 0 : i32
    %26 = arith.cmpi ne, %25, %c0_i32_15 : i32
    scf.if %26 {
      %c256_i32_18 = arith.constant 256 : i32
      %30 = arith.muli %21, %c256_i32_18 : i32
      %31 = tpu.iota {dimensions = array<i32: 1>} : vector<128x256xi32>
      %32 = vector.broadcast %30 : i32 to vector<128x256xi32>
      %33 = arith.addi %32, %31 : vector<128x256xi32>
      %c200_i32_19 = arith.constant 200 : i32
      %34 = vector.broadcast %c200_i32_19 : i32 to vector<128x256xi32>
      %35 = arith.cmpi slt, %33, %34 : vector<128x256xi32>
      %cst_20 = arith.constant 0.000000e+00 : f32
      %36 = vector.broadcast %cst_20 : f32 to vector<128x256xf32>
      %37 = arith.select %35, %19, %36 : vector<128x256xi1>, vector<128x256xf32>
      %c0_21 = arith.constant 0 : index
      %c0_22 = arith.constant 0 : index
      %c0_23 = arith.constant 0 : index
      %c0_24 = arith.constant 0 : index
      %38 = vector.load %arg8[%c0_21, %c0_22, %c0_23, %c0_24] : memref<1x1x128x1xf32, #tpu.memory_space<vmem>>, vector<1x1x128x1xf32>
      %39 = vector.shape_cast %38 : vector<1x1x128x1xf32> to vector<128x1xf32>
      %cst_25 = arith.constant dense<0xFF800000> : vector<128xf32>
      %40 = vector.multi_reduction <maximumf>, %37, %cst_25 [1] : vector<128x256xf32> to vector<128xf32>
      %41 = vector.shape_cast %40 : vector<128xf32> to vector<128x1xf32>
      %42 = arith.maximumf %39, %41 : vector<128x1xf32>
      %c0_26 = arith.constant 0 : index
      %c0_27 = arith.constant 0 : index
      %c0_28 = arith.constant 0 : index
      %c0_29 = arith.constant 0 : index
      %43 = vector.load %arg8[%c0_26, %c0_27, %c0_28, %c0_29] : memref<1x1x128x1xf32, #tpu.memory_space<vmem>>, vector<1x1x128x1xf32>
      %44 = vector.shape_cast %43 : vector<1x1x128x1xf32> to vector<128x1xf32>
      %45 = vector.shape_cast %42 : vector<128x1xf32> to vector<1x1x128x1xf32>
      tpu.vector_store %arg8[%c0_26, %c0_27, %c0_28, %c0_29], %45 {strides = array<i32>} : memref<1x1x128x1xf32, #tpu.memory_space<vmem>>, vector<1x1x128x1xf32>,
    } else {
    }
    %c200_i32_16 = arith.constant 200 : i32
    %27 = arith.cmpi sle, %23, %c200_i32_16 : i32
    %28 = arith.extui %27 : i1 to i32
    %c0_i32_17 = arith.constant 0 : i32
    %29 = arith.cmpi ne, %28, %c0_i32_17 : i32
    scf.if %29 {
      %c0_18 = arith.constant 0 : index
      %c0_19 = arith.constant 0 : index
      %c0_20 = arith.constant 0 : index
      %c0_21 = arith.constant 0 : index
      %30 = vector.load %arg8[%c0_18, %c0_19, %c0_20, %c0_21] : memref<1x1x128x1xf32, #tpu.memory_space<vmem>>, vector<1x1x128x1xf32>
      %31 = vector.shape_cast %30 : vector<1x1x128x1xf32> to vector<128x1xf32>
      %cst_22 = arith.constant dense<0xFF800000> : vector<128xf32>
      %32 = vector.multi_reduction <maximumf>, %19, %cst_22 [1] : vector<128x256xf32> to vector<128xf32>
      %33 = vector.shape_cast %32 : vector<128xf32> to vector<128x1xf32>
      %34 = arith.maximumf %31, %33 : vector<128x1xf32>
      %c0_23 = arith.constant 0 : index
      %c0_24 = arith.constant 0 : index
      %c0_25 = arith.constant 0 : index
      %c0_26 = arith.constant 0 : index
      %35 = vector.load %arg8[%c0_23, %c0_24, %c0_25, %c0_26] : memref<1x1x128x1xf32, #tpu.memory_space<vmem>>, vector<1x1x128x1xf32>
      %36 = vector.shape_cast %35 : vector<1x1x128x1xf32> to vector<128x1xf32>
      %37 = vector.shape_cast %34 : vector<128x1xf32> to vector<1x1x128x1xf32>
      tpu.vector_store %arg8[%c0_23, %c0_24, %c0_25, %c0_26], %37 {strides = array<i32>} : memref<1x1x128x1xf32, #tpu.memory_space<vmem>>, vector<1x1x128x1xf32>,
    } else {
    }
    return
  }
  func.func @transform_0(%arg0: i32, %arg1: i32, %arg2: i32) -> (i32, i32, i32) {
    %c1_i32 = arith.constant 1 : i32
    %0 = arith.muli %arg0, %c1_i32 : i32
    %1 = arith.addi %0, %arg2 : i32
    %c0_i32 = arith.constant 0 : i32
    %c0_i32_0 = arith.constant 0 : i32
    return %arg1, %c0_i32, %1 : i32, i32, i32
  }
  func.func @transform_1(%arg0: i32, %arg1: i32, %arg2: i32) -> (i32, i32) {
    %c0_i32 = arith.constant 0 : i32
    %c0_i32_0 = arith.constant 0 : i32
    %c0_i32_1 = arith.constant 0 : i32
    return %c0_i32, %c0_i32_0 : i32, i32
  }
  func.func @transform_2(%arg0: i32, %arg1: i32, %arg2: i32) -> (i32, i32) {
    %c0_i32 = arith.constant 0 : i32
    %c0_i32_0 = arith.constant 0 : i32
    %c0_i32_1 = arith.constant 0 : i32
    return %c0_i32, %c0_i32_0 : i32, i32
  }
  func.func @transform_3(%arg0: i32, %arg1: i32, %arg2: i32) -> (i32, i32) {
    %c0_i32 = arith.constant 0 : i32
    %c0_i32_0 = arith.constant 0 : i32
    %c0_i32_1 = arith.constant 0 : i32
    return %c0_i32, %c0_i32_0 : i32, i32
  }
  func.func @transform_4(%arg0: i32, %arg1: i32, %arg2: i32) -> (i32, i32) {
    %c0_i32 = arith.constant 0 : i32
    %c0_i32_0 = arith.constant 0 : i32
    %c0_i32_1 = arith.constant 0 : i32
    return %c0_i32, %c0_i32_0 : i32, i32
  }
  func.func @transform_5(%arg0: i32, %arg1: i32, %arg2: i32) -> (i32, i32, i32, i32) {
    %c0_i32 = arith.constant 0 : i32
    %c0_i32_0 = arith.constant 0 : i32
    %c0_i32_1 = arith.constant 0 : i32
    return %arg0, %arg1, %c0_i32, %c0_i32_0 : i32, i32, i32, i32
  }
}

</mosaic_0001>

<llo_original>
// kernel: tpu_custom_call.1
$region0: #{tpu_custom_call.1}
  #allocation0 [shape = 'u32[]', space=smem, size = 0x4, offset = 0x4, fixed_abs, tag = 'smem constant byte address 0x4 - core index']
  #allocation1 [shape = 'u32[144,128]{1,0:T(1,128)}', space=vmem, size = 0x12000, scoped, tag = 'internal scratch']
  %s0 = inlined_call_operand.vmem [shape: bf16[2,8,256], index: 0, kind: input, shape index: {}]
  %s1 = inlined_call_operand.vmem [shape: bf16[128,8], index: 1, kind: input, shape index: {}]
  %s2 = inlined_call_operand.vmem [shape: f32[128,1], index: 2, kind: input, shape index: {}]
  %s3 = inlined_call_operand.vmem [shape: bf16[128,128], index: 3, kind: input, shape index: {}]
  %s4 = inlined_call_operand.vmem [shape: f32[128,1], index: 4, kind: input, shape index: {}]
  %s5 = inlined_call_operand.vmem [shape: f32[1,2,128,1], index: 5, kind: output, shape index: {}]
  %s6 = sld [smem:[#allocation0]]
  $region65: #{tpu_custom_call.1} parent=0
    _
  %s8 = ssub.s32 1, %s6
  %s9 = scalar_select 0, %s8, %s6
  loop: start=0, step=1, limit=4
  $region2: #{tpu_custom_call.1} parent=0 // loop_pre_header
    _
  $region3: #{tpu_custom_call.1} parent=0 // loop_header
    %s11 = sphi 0, %s15
    %p12 = scmp.ge.s32.totalorder %s11, 4
    %s18 = sphi 0, %s37
    %s19 = sphi 0, %s33
    %s20 = sphi 0, %s29
    %s21 = sphi 0, %s18
    %s22 = sphi 0, %s19
    %s23 = sphi 0, %s20
    %s24 = sphi 0, %s21
    %s25 = sphi 0, %s22
    %s26 = sphi 0, %s23
    %s44 = sphi 0, %s46
    %s47 = sphi 0, %s44
    %s48 = sphi 0, %s47
    %s64 = sphi 0, %s48
    %s68 = sphi 0, %s68
    %s70 = sphi 0, %s68
    %s71 = sphi 0, %s70
    %s85 = sphi 0, %s71
    %s89 = sphi 0, %s89
    %s91 = sphi 0, %s89
    %s92 = sphi 0, %s91
    %s106 = sphi 0, %s92
    %s110 = sphi 0, %s110
    %s112 = sphi 0, %s110
    %s113 = sphi 0, %s112
    %s127 = sphi 0, %s113
    %s131 = sphi 0, %s131
    %s133 = sphi 0, %s131
    %s134 = sphi 0, %s133
    %s148 = sphi 0, %s134
    %s156 = sphi 0, %s158
    %s159 = sphi 0, %s156
    %s160 = sphi 0, %s159
    %s176 = sphi 0, %s160
  $region4: #{tpu_custom_call.1} parent=0 // loop_header_branch
    %14 = sbr.rel (%p12) target = $region8
  $region5: #{tpu_custom_call.1} parent=0 // loop_body
    %s16 = ssub.s32 %s11, 1
    %s17 = ssub.s32 %s11, 2
    %s27 = sadd.s32 1, %s20
    %p28 = scmp.ge.s32.totalorder %s27, 1
    %s29 = scalar_select %p28, 0, %s27
    %s30 = sadd.s32 1, %s19
    %s31 = scalar_select %p28, %s30, %s19
    %p32 = scmp.ge.s32.totalorder %s31, 2
    %s33 = scalar_select %p32, 0, %s31
    %s34 = sadd.s32 1, %s18
    %s35 = scalar_select %p32, %s34, %s18
    %p36 = scmp.ge.s32.totalorder %s35, 1
    %s37 = scalar_select %p36, 0, %s35
    %s38 = sadd.s32 %s18, %s20
    %s39 = sadd.s32 %s37, %s29
    %s40 = ssub.s32 %s19, %s33
    %s41 = ssub.s32 %s38, %s39
    %s42 = sor.u32 %s40, %s41
    %p43 = scmp.eq.s32.totalorder %s42, 0
    %s45 = sadd.s32 %s44, 1
    %s46 = scalar_select %p43, %s44, %s45
    %p49 = pneg %p43
    %p50 = scmp.eq.s32.totalorder %s11, 1
    %p51 = por %p49, %p50
    %p52 = scmp.ne.s32.totalorder %s44, %s47
    %p53 = scmp.eq.s32.totalorder %s11, 0
    %p54 = por %p52, %p53
    %p55 = scmp.ne.s32.totalorder %s44, %s47
    %p56 = scmp.eq.s32.totalorder %s16, 1
    %p57 = por %p55, %p56
    %p58 = scmp.ne.s32.totalorder %s47, %s48
    %p59 = scmp.eq.s32.totalorder %s16, 0
    %p60 = por %p58, %p59
    %p61 = scmp.ne.s32.totalorder %s47, %s48
    %p62 = scmp.eq.s32.totalorder %s17, 1
    %p63 = por %p61, %p62
    %p65 = scmp.ne.s32.totalorder %s48, %s64
    %p66 = scmp.eq.s32.totalorder %s17, 0
    %p67 = por %p65, %p66
    %s69 = sadd.s32 %s68, 1
    %p72 = scmp.eq.s32.totalorder %s11, 1
    %p73 = scmp.ne.s32.totalorder %s68, %s70
    %p74 = scmp.eq.s32.totalorder %s11, 0
    %p75 = por %p73, %p74
    %p76 = scmp.ne.s32.totalorder %s68, %s70
    %p77 = scmp.eq.s32.totalorder %s16, 1
    %p78 = por %p76, %p77
    %p79 = scmp.ne.s32.totalorder %s70, %s71
    %p80 = scmp.eq.s32.totalorder %s16, 0
    %p81 = por %p79, %p80
    %p82 = scmp.ne.s32.totalorder %s70, %s71
    %p83 = scmp.eq.s32.totalorder %s17, 1
    %p84 = por %p82, %p83
    %p86 = scmp.ne.s32.totalorder %s71, %s85
    %p87 = scmp.eq.s32.totalorder %s17, 0
    %p88 = por %p86, %p87
    %s90 = sadd.s32 %s89, 1
    %p93 = scmp.eq.s32.totalorder %s11, 1
    %p94 = scmp.ne.s32.totalorder %s89, %s91
    %p95 = scmp.eq.s32.totalorder %s11, 0
    %p96 = por %p94, %p95
    %p97 = scmp.ne.s32.totalorder %s89, %s91
    %p98 = scmp.eq.s32.totalorder %s16, 1
    %p99 = por %p97, %p98
    %p100 = scmp.ne.s32.totalorder %s91, %s92
    %p101 = scmp.eq.s32.totalorder %s16, 0
    %p102 = por %p100, %p101
    %p103 = scmp.ne.s32.totalorder %s91, %s92
    %p104 = scmp.eq.s32.totalorder %s17, 1
    %p105 = por %p103, %p104
    %p107 = scmp.ne.s32.totalorder %s92, %s106
    %p108 = scmp.eq.s32.totalorder %s17, 0
    %p109 = por %p107, %p108
    %s111 = sadd.s32 %s110, 1
    %p114 = scmp.eq.s32.totalorder %s11, 1
    %p115 = scmp.ne.s32.totalorder %s110, %s112
    %p116 = scmp.eq.s32.totalorder %s11, 0
    %p117 = por %p115, %p116
    %p118 = scmp.ne.s32.totalorder %s110, %s112
    %p119 = scmp.eq.s32.totalorder %s16, 1
    %p120 = por %p118, %p119
    %p121 = scmp.ne.s32.totalorder %s112, %s113
    %p122 = scmp.eq.s32.totalorder %s16, 0
    %p123 = por %p121, %p122
    %p124 = scmp.ne.s32.totalorder %s112, %s113
    %p125 = scmp.eq.s32.totalorder %s17, 1
    %p126 = por %p124, %p125
    %p128 = scmp.ne.s32.totalorder %s113, %s127
    %p129 = scmp.eq.s32.totalorder %s17, 0
    %p130 = por %p128, %p129
    %s132 = sadd.s32 %s131, 1
    %p135 = scmp.eq.s32.totalorder %s11, 1
    %p136 = scmp.ne.s32.totalorder %s131, %s133
    %p137 = scmp.eq.s32.totalorder %s11, 0
    %p138 = por %p136, %p137
    %p139 = scmp.ne.s32.totalorder %s131, %s133
    %p140 = scmp.eq.s32.totalorder %s16, 1
    %p141 = por %p139, %p140
    %p142 = scmp.ne.s32.totalorder %s133, %s134
    %p143 = scmp.eq.s32.totalorder %s16, 0
    %p144 = por %p142, %p143
    %p145 = scmp.ne.s32.totalorder %s133, %s134
    %p146 = scmp.eq.s32.totalorder %s17, 1
    %p147 = por %p145, %p146
    %p149 = scmp.ne.s32.totalorder %s134, %s148
    %p150 = scmp.eq.s32.totalorder %s17, 0
    %p151 = por %p149, %p150
    %s152 = ssub.s32 %s18, %s37
    %s153 = ssub.s32 %s19, %s33
    %s154 = sor.u32 %s152, %s153
    %p155 = scmp.eq.s32.totalorder %s154, 0
    %s157 = sadd.s32 %s156, 1
    %s158 = scalar_select %p155, %s156, %s157
    %p161 = pneg %p155
    %p162 = scmp.eq.s32.totalorder %s11, 1
    %p163 = por %p161, %p162
    %p164 = scmp.ne.s32.totalorder %s156, %s159
    %p165 = scmp.eq.s32.totalorder %s11, 0
    %p166 = por %p164, %p165
    %p167 = scmp.ne.s32.totalorder %s156, %s159
    %p168 = scmp.eq.s32.totalorder %s16, 1
    %p169 = por %p167, %p168
    %p170 = scmp.ne.s32.totalorder %s159, %s160
    %p171 = scmp.eq.s32.totalorder %s16, 0
    %p172 = por %p170, %p171
    %p173 = scmp.ne.s32.totalorder %s159, %s160
    %p174 = scmp.eq.s32.totalorder %s17, 1
    %p175 = por %p173, %p174
    %p177 = scmp.ne.s32.totalorder %s160, %s176
    %p178 = scmp.eq.s32.totalorder %s17, 0
    %p179 = por %p177, %p178
    %p180 = scmp.le.s32.totalorder 1, %s11
    %p181 = scmp.lt.s32.totalorder %s11, 3
    %p182 = pnand %p180, %p181
    %p183 = pneg %p182
    // Predicated region
    $region9: #{tpu_custom_call.1} parent=5 // pred_check
      _
    $region10: #{tpu_custom_call.1} parent=5 // pred_check_branch
      %185 = sbr.rel (%p182) target = $region12
    $region11: #{tpu_custom_call.1} parent=5 // pred_region
      %s186 = ssub.s32 %s11, 1
      // Predicated region
      $region13: #{tpu_custom_call.1} parent=11 // pred_check
        %p187 = pneg %p81
      $region14: #{tpu_custom_call.1} parent=11 // pred_check_branch
        %189 = sbr.rel (%p187) target = $region16
      $region15: #{tpu_custom_call.1} parent=11 // pred_region
        _
      $region16: #{tpu_custom_call.1} parent=11 // pred_fallthru
        _
      // Predicated region
      $region17: #{tpu_custom_call.1} parent=11 // pred_check
        %p190 = pneg %p102
      $region18: #{tpu_custom_call.1} parent=11 // pred_check_branch
        %192 = sbr.rel (%p190) target = $region20
      $region19: #{tpu_custom_call.1} parent=11 // pred_region
        _
      $region20: #{tpu_custom_call.1} parent=11 // pred_fallthru
        _
      // Predicated region
      $region21: #{tpu_custom_call.1} parent=11 // pred_check
        %p193 = pneg %p123
      $region22: #{tpu_custom_call.1} parent=11 // pred_check_branch
        %195 = sbr.rel (%p193) target = $region24
      $region23: #{tpu_custom_call.1} parent=11 // pred_region
        _
      $region24: #{tpu_custom_call.1} parent=11 // pred_fallthru
        _
      // Predicated region
      $region25: #{tpu_custom_call.1} parent=11 // pred_check
        %p196 = pneg %p144
      $region26: #{tpu_custom_call.1} parent=11 // pred_check_branch
        %198 = sbr.rel (%p196) target = $region28
      $region27: #{tpu_custom_call.1} parent=11 // pred_region
        _
      $region28: #{tpu_custom_call.1} parent=11 // pred_fallthru
        _
    $region12: #{tpu_custom_call.1} parent=5 // pred_fallthru
      _
    %p199 = scmp.lt.s32.totalorder %s11, 2
    // Predicated region
    $region29: #{tpu_custom_call.1} parent=5 // pred_check
      %p200 = pneg %p199
    $region30: #{tpu_custom_call.1} parent=5 // pred_check_branch
      %202 = sbr.rel (%p200) target = $region32
    $region31: #{tpu_custom_call.1} parent=5 // pred_region
      // Predicated region
      $region33: #{tpu_custom_call.1} parent=31 // pred_check
        %p203 = pneg %p54
      $region34: #{tpu_custom_call.1} parent=31 // pred_check_branch
        %205 = sbr.rel (%p203) target = $region36
      $region35: #{tpu_custom_call.1} parent=31 // pred_region
        %s206 = sadd.s32 %s18, %s20
        %s207 = smul.u32 2, %s206
        %p208 = scmp.lt.s32.totalorder %s19, 1
        %s209 = scalar_select %p208, %s19, 1
        %p210 = scmp.lt.s32.totalorder %s207, 1
        %s211 = scalar_select %p210, %s207, 1
        %s212 = smul.addr %s209, 2
        %s213 = sadd.s32 %s211, %s212
        %s214 = smul.addr %s213, 4
        %s215 = scalar_lea.vmem %s0, %s214
        %s216 = sadd.s32 %s18, %s20
        %s217 = smul.u32 2, %s216
      $region36: #{tpu_custom_call.1} parent=31 // pred_fallthru
        _
    $region32: #{tpu_custom_call.1} parent=5 // pred_fallthru
      _
    %p218 = scmp.le.s32.totalorder 1, %s11
    %p219 = scmp.lt.s32.totalorder %s11, 3
    %p220 = pnand %p218, %p219
    %p221 = pneg %p220
    // Predicated region
    $region37: #{tpu_custom_call.1} parent=5 // pred_check
      _
    $region38: #{tpu_custom_call.1} parent=5 // pred_check_branch
      %223 = sbr.rel (%p220) target = $region40
    $region39: #{tpu_custom_call.1} parent=5 // pred_region
      %s224 = ssub.s32 %s11, 1
      %s225 = sadd.s32 %s21, %s23
      %s226 = smul.u32 2, %s225
      %p227 = scmp.lt.s32.totalorder %s22, 1
      %s228 = scalar_select %p227, %s22, 1
      %p229 = scmp.lt.s32.totalorder %s226, 1
      %s230 = scalar_select %p229, %s226, 1
      %s231 = smul.addr %s228, 2
      %s232 = sadd.s32 %s230, %s231
      %s233 = smul.addr %s232, 4
      %s234 = scalar_lea.vmem %s0, %s233
      %p235 = pneg %p60
      %p236 = pneg %p57
      %p237 = pneg %p81
      %p238 = pneg %p78
      %p239 = pneg %p102
      %p240 = pneg %p99
      %p241 = pneg %p123
      %p242 = pneg %p120
      %p243 = pneg %p144
      %p244 = pneg %p141
      %p245 = pneg %p172
      %p246 = pneg %p169
      %p247 = scmp.lt.s32.totalorder %s21, 0
      %s248 = scalar_select %p247, %s21, 0
      %p249 = scmp.lt.s32.totalorder %s22, 1
      %s250 = scalar_select %p249, %s22, 1
      %s251 = smul.addr %s250, 16
      %s252 = smul.addr %s248, 32
      %s253 = sadd.s32 %s251, %s252
      %s254 = smul.addr %s253, 8
      %s255 = scalar_lea.vmem %s5, %s254
      %s256 = sadd.s32 %s21, %s23
      %s257 = smul.u32 2, %s256
      %p258 = scmp.lt.s32.totalorder %s22, 1
      %s259 = scalar_select %p258, %s22, 1
      %p260 = scmp.lt.s32.totalorder %s257, 1
      %s261 = scalar_select %p260, %s257, 1
      %s262 = smul.addr %s259, 2
      %s263 = sadd.s32 %s261, %s262
      %s264 = smul.addr %s263, 4
      %s265 = scalar_lea.vmem %s0, %s264
      %s266 = sadd.s32 %s21, %s23
      %s267 = smul.u32 2, %s266
      %p268 = scmp.lt.s32.totalorder %s21, 0
      %s269 = scalar_select %p268, %s21, 0
      %p270 = scmp.lt.s32.totalorder %s22, 1
      %s271 = scalar_select %p270, %s22, 1
      %s272 = smul.addr %s271, 16
      %s273 = smul.addr %s269, 32
      %s274 = sadd.s32 %s272, %s273
      %s275 = smul.addr %s274, 8
      %s276 = scalar_lea.vmem %s5, %s275
      %p278 = scmp.eq.s32.totalorder %s23, 0
      // Predicated region
      $region41: #{tpu_custom_call.1} parent=39 // pred_check
        %p279 = pneg %p278
      $region42: #{tpu_custom_call.1} parent=39 // pred_check_branch
        %281 = sbr.rel (%p279) target = $region44
      $region43: #{tpu_custom_call.1} parent=39 // pred_region
        %vm282 = vcmask 7168
        %283 = vst.msk [vmem:[%s276] sm:$0xff] %vm282, 0.0
        %284 = vst.msk [vmem:[%s276 + $0x8] sm:$0xff] %vm282, 0.0
        %285 = vst.msk [vmem:[%s276 + $0x10] sm:$0xff] %vm282, 0.0
        %286 = vst.msk [vmem:[%s276 + $0x18] sm:$0xff] %vm282, 0.0
        %287 = vst.msk [vmem:[%s276 + $0x20] sm:$0xff] %vm282, 0.0
        %288 = vst.msk [vmem:[%s276 + $0x28] sm:$0xff] %vm282, 0.0
        %289 = vst.msk [vmem:[%s276 + $0x30] sm:$0xff] %vm282, 0.0
        %290 = vst.msk [vmem:[%s276 + $0x38] sm:$0xff] %vm282, 0.0
        %291 = vst.msk [vmem:[%s276 + $0x40] sm:$0xff] %vm282, 0.0
        %292 = vst.msk [vmem:[%s276 + $0x48] sm:$0xff] %vm282, 0.0
        %293 = vst.msk [vmem:[%s276 + $0x50] sm:$0xff] %vm282, 0.0
        %294 = vst.msk [vmem:[%s276 + $0x58] sm:$0xff] %vm282, 0.0
        %295 = vst.msk [vmem:[%s276 + $0x60] sm:$0xff] %vm282, 0.0
        %296 = vst.msk [vmem:[%s276 + $0x68] sm:$0xff] %vm282, 0.0
        %297 = vst.msk [vmem:[%s276 + $0x70] sm:$0xff] %vm282, 0.0
        %298 = vst.msk [vmem:[%s276 + $0x78] sm:$0xff] %vm282, 0.0
      $region44: #{tpu_custom_call.1} parent=39 // pred_fallthru
        _
      %v299 = vld [vmem:[%s265] sm:$0xff]
      %v300 = vld [vmem:[%s1] sm:$0xf]
      %v301 = vld [vmem:[%s1 + $0x4] sm:$0xf]
      %v302 = vld [vmem:[%s1 + $0x8] sm:$0xf]
      %v303 = vld [vmem:[%s1 + $0xc] sm:$0xf]
      %v304 = vld [vmem:[%s1 + $0x10] sm:$0xf]
      %v305 = vld [vmem:[%s1 + $0x14] sm:$0xf]
      %v306 = vld [vmem:[%s1 + $0x18] sm:$0xf]
      %v307 = vld [vmem:[%s1 + $0x1c] sm:$0xf]
      %v308 = vld [vmem:[%s1 + $0x20] sm:$0xf]
      %v309 = vld [vmem:[%s1 + $0x24] sm:$0xf]
      %v310 = vld [vmem:[%s1 + $0x28] sm:$0xf]
      %v311 = vld [vmem:[%s1 + $0x2c] sm:$0xf]
      %v312 = vld [vmem:[%s1 + $0x30] sm:$0xf]
      %v313 = vld [vmem:[%s1 + $0x34] sm:$0xf]
      %v314 = vld [vmem:[%s1 + $0x38] sm:$0xf]
      %v315 = vld [vmem:[%s1 + $0x3c] sm:$0xf]
      %v316 = vld [vmem:[%s2] sm:$0xff]
      %v317 = vld [vmem:[%s2 + $0x8] sm:$0xff]
      %v318 = vld [vmem:[%s2 + $0x10] sm:$0xff]
      %v319 = vld [vmem:[%s2 + $0x18] sm:$0xff]
      %v320 = vld [vmem:[%s2 + $0x20] sm:$0xff]
      %v321 = vld [vmem:[%s2 + $0x28] sm:$0xff]
      %v322 = vld [vmem:[%s2 + $0x30] sm:$0xff]
      %v323 = vld [vmem:[%s2 + $0x38] sm:$0xff]
      %v324 = vld [vmem:[%s2 + $0x40] sm:$0xff]
      %v325 = vld [vmem:[%s2 + $0x48] sm:$0xff]
      %v326 = vld [vmem:[%s2 + $0x50] sm:$0xff]
      %v327 = vld [vmem:[%s2 + $0x58] sm:$0xff]
      %v328 = vld [vmem:[%s2 + $0x60] sm:$0xff]
      %v329 = vld [vmem:[%s2 + $0x68] sm:$0xff]
      %v330 = vld [vmem:[%s2 + $0x70] sm:$0xff]
      %v331 = vld [vmem:[%s2 + $0x78] sm:$0xff]
      %333 = vset.pattern.permute.xlu0 0
      %334 = vperm.xlu0 %333, %v316
      %v335 = vpop.permute.xlu0 %334
      %338 = vset.pattern.permute.xlu0 0
      %339 = vperm.xlu0 %338, %v317
      %v340 = vpop.permute.xlu0 %339
      %343 = vset.pattern.permute.xlu0 0
      %344 = vperm.xlu0 %343, %v318
      %v345 = vpop.permute.xlu0 %344
      %348 = vset.pattern.permute.xlu0 0
      %349 = vperm.xlu0 %348, %v319
      %v350 = vpop.permute.xlu0 %349
      %353 = vset.pattern.permute.xlu0 0
      %354 = vperm.xlu0 %353, %v320
      %v355 = vpop.permute.xlu0 %354
      %358 = vset.pattern.permute.xlu0 0
      %359 = vperm.xlu0 %358, %v321
      %v360 = vpop.permute.xlu0 %359
      %363 = vset.pattern.permute.xlu0 0
      %364 = vperm.xlu0 %363, %v322
      %v365 = vpop.permute.xlu0 %364
      %368 = vset.pattern.permute.xlu0 0
      %369 = vperm.xlu0 %368, %v323
      %v370 = vpop.permute.xlu0 %369
      %373 = vset.pattern.permute.xlu0 0
      %374 = vperm.xlu0 %373, %v324
      %v375 = vpop.permute.xlu0 %374
      %378 = vset.pattern.permute.xlu0 0
      %379 = vperm.xlu0 %378, %v325
      %v380 = vpop.permute.xlu0 %379
      %383 = vset.pattern.permute.xlu0 0
      %384 = vperm.xlu0 %383, %v326
      %v385 = vpop.permute.xlu0 %384
      %388 = vset.pattern.permute.xlu0 0
      %389 = vperm.xlu0 %388, %v327
      %v390 = vpop.permute.xlu0 %389
      %393 = vset.pattern.permute.xlu0 0
      %394 = vperm.xlu0 %393, %v328
      %v395 = vpop.permute.xlu0 %394
      %398 = vset.pattern.permute.xlu0 0
      %399 = vperm.xlu0 %398, %v329
      %v400 = vpop.permute.xlu0 %399
      %403 = vset.pattern.permute.xlu0 0
      %404 = vperm.xlu0 %403, %v330
      %v405 = vpop.permute.xlu0 %404
      %408 = vset.pattern.permute.xlu0 0
      %409 = vperm.xlu0 %408, %v331
      %v410 = vpop.permute.xlu0 %409
      %v428 = vunpack.c.l.b16 %v300
      %v429 = vunpack.c.l.b16 %v301
      %v430 = vunpack.c.l.b16 %v302
      %v431 = vunpack.c.l.b16 %v303
      %v432 = vunpack.c.l.b16 %v304
      %v433 = vunpack.c.l.b16 %v305
      %v434 = vunpack.c.l.b16 %v306
      %v435 = vunpack.c.l.b16 %v307
      %v436 = vunpack.c.l.b16 %v308
      %v437 = vunpack.c.l.b16 %v309
      %v438 = vunpack.c.l.b16 %v310
      %v439 = vunpack.c.l.b16 %v311
      %v440 = vunpack.c.l.b16 %v312
      %v441 = vunpack.c.l.b16 %v313
      %v442 = vunpack.c.l.b16 %v314
      %v443 = vunpack.c.l.b16 %v315
      %v444 = vpack.c.b16 %v429, %v428
      %v445 = vpack.c.b16 %v431, %v430
      %v446 = vpack.c.b16 %v433, %v432
      %v447 = vpack.c.b16 %v435, %v434
      %v448 = vpack.c.b16 %v437, %v436
      %v449 = vpack.c.b16 %v439, %v438
      %v450 = vpack.c.b16 %v441, %v440
      %v451 = vpack.c.b16 %v443, %v442
      %v453 = vunpack.c.l.b16 %v299
      %v454 = vunpack.c.h.b16 %v299
      %v455 = vpack.c.b16 %v453, %v453
      %v456 = vpack.c.b16 %v454, %v454
      %vm457 = vcmask 64512
      %v459 = vsel %vm457, %v444, 0
      %v462 = vsel %vm457, %v445, 0
      %v465 = vsel %vm457, %v446, 0
      %v468 = vsel %vm457, %v447, 0
      %v471 = vsel %vm457, %v448, 0
      %v474 = vsel %vm457, %v449, 0
      %v477 = vsel %vm457, %v450, 0
      %v480 = vsel %vm457, %v451, 0
      %vm482 = vcmask 1043456
      %v484 = vsel %vm482, %v455, 0
      %v487 = vsel %vm482, %v456, 0
      %489 = vmatprep.subr.bf16.mxu0 %v487
      %490 = vmatpush1.bf16.msra.mxu0 %v484
      %491 = vmatprep.subr.bf16.mxu0 0
      %492 = vmatpush1.bf16.msra.mxu0 0
      %493 = vmatprep.subr.bf16.mxu0 0
      %494 = vmatpush1.bf16.msra.mxu0 0
      %495 = vmatprep.subr.bf16.mxu0 0
      %496 = vmatpush1.bf16.msra.mxu0 0
      %497 = vmatprep.subr.bf16.mxu0 0
      %498 = vmatpush1.bf16.msra.mxu0 0
      %499 = vmatprep.subr.bf16.mxu0 0
      %500 = vmatpush1.bf16.msra.mxu0 0
      %501 = vmatprep.subr.bf16.mxu0 0
      %502 = vmatpush1.bf16.msra.mxu0 0
      %503 = vmatprep.subr.bf16.mxu0 0
      %504 = vmatpush1.bf16.msra.mxu0 0
      %505 = vmatprep.subr.bf16.mxu0 0
      %506 = vmatpush1.bf16.msra.mxu0 0
      %507 = vmatprep.subr.bf16.mxu0 0
      %508 = vmatpush1.bf16.msra.mxu0 0
      %509 = vmatprep.subr.bf16.mxu0 0
      %510 = vmatpush1.bf16.msra.mxu0 0
      %511 = vmatprep.subr.bf16.mxu0 0
      %512 = vmatpush1.bf16.msra.mxu0 0
      %513 = vmatprep.subr.bf16.mxu0 0
      %514 = vmatpush1.bf16.msra.mxu0 0
      %515 = vmatprep.subr.bf16.mxu0 0
      %516 = vmatpush1.bf16.msra.mxu0 0
      %517 = vmatprep.subr.bf16.mxu0 0
      %518 = vmatpush1.bf16.msra.mxu0 0
      %519 = vmatprep.subr.bf16.mxu0 0
      %520 = vmatpush1.bf16.msra.mxu0 0
      %521 = vmatprep.mubr.bf16.mxu0 0
      %522 = vmatmul.mubr.bf16.gmra.mrb[0].mxu0 %v459
      %v523 = vpop.f32.mrb[0].mxu0
      %v524 = vadd.f32 %v335, %v523
      %v525 = vpop.f32.mrb[0].mxu0
      %v526 = vadd.f32 %v335, %v525
      %v527 = vpop.f32.mrb[0].mxu0
      %v528 = vadd.f32 %v340, %v527
      %v529 = vpop.f32.mrb[0].mxu0
      %v530 = vadd.f32 %v340, %v529
      %531 = vmatprep.mubr.bf16.mxu0 0
      %532 = vmatmul.mubr.bf16.gmra.mrb[0].mxu0 %v462
      %v533 = vpop.f32.mrb[0].mxu0
      %v534 = vadd.f32 %v345, %v533
      %v535 = vpop.f32.mrb[0].mxu0
      %v536 = vadd.f32 %v345, %v535
      %v537 = vpop.f32.mrb[0].mxu0
      %v538 = vadd.f32 %v350, %v537
      %v539 = vpop.f32.mrb[0].mxu0
      %v540 = vadd.f32 %v350, %v539
      %541 = vmatprep.mubr.bf16.mxu0 0
      %542 = vmatmul.mubr.bf16.gmra.mrb[0].mxu0 %v465
      %v543 = vpop.f32.mrb[0].mxu0
      %v544 = vadd.f32 %v355, %v543
      %v545 = vpop.f32.mrb[0].mxu0
      %v546 = vadd.f32 %v355, %v545
      %v547 = vpop.f32.mrb[0].mxu0
      %v548 = vadd.f32 %v360, %v547
      %v549 = vpop.f32.mrb[0].mxu0
      %v550 = vadd.f32 %v360, %v549
      %551 = vmatprep.mubr.bf16.mxu0 0
      %552 = vmatmul.mubr.bf16.gmra.mrb[0].mxu0 %v468
      %v553 = vpop.f32.mrb[0].mxu0
      %v554 = vadd.f32 %v365, %v553
      %v555 = vpop.f32.mrb[0].mxu0
      %v556 = vadd.f32 %v365, %v555
      %v557 = vpop.f32.mrb[0].mxu0
      %v558 = vadd.f32 %v370, %v557
      %v559 = vpop.f32.mrb[0].mxu0
      %v560 = vadd.f32 %v370, %v559
      %561 = vmatprep.mubr.bf16.mxu0 0
      %562 = vmatmul.mubr.bf16.gmra.mrb[0].mxu0 %v471
      %v563 = vpop.f32.mrb[0].mxu0
      %v564 = vadd.f32 %v375, %v563
      %v565 = vpop.f32.mrb[0].mxu0
      %v566 = vadd.f32 %v375, %v565
      %v567 = vpop.f32.mrb[0].mxu0
      %v568 = vadd.f32 %v380, %v567
      %v569 = vpop.f32.mrb[0].mxu0
      %v570 = vadd.f32 %v380, %v569
      %571 = vmatprep.mubr.bf16.mxu0 0
      %572 = vmatmul.mubr.bf16.gmra.mrb[0].mxu0 %v474
      %v573 = vpop.f32.mrb[0].mxu0
      %v574 = vadd.f32 %v385, %v573
      %v575 = vpop.f32.mrb[0].mxu0
      %v576 = vadd.f32 %v385, %v575
      %v577 = vpop.f32.mrb[0].mxu0
      %v578 = vadd.f32 %v390, %v577
      %v579 = vpop.f32.mrb[0].mxu0
      %v580 = vadd.f32 %v390, %v579
      %581 = vmatprep.mubr.bf16.mxu0 0
      %582 = vmatmul.mubr.bf16.gmra.mrb[0].mxu0 %v477
      %v583 = vpop.f32.mrb[0].mxu0
      %v584 = vadd.f32 %v395, %v583
      %v585 = vpop.f32.mrb[0].mxu0
      %v586 = vadd.f32 %v395, %v585
      %v587 = vpop.f32.mrb[0].mxu0
      %v588 = vadd.f32 %v400, %v587
      %v589 = vpop.f32.mrb[0].mxu0
      %v590 = vadd.f32 %v400, %v589
      %591 = vmatprep.mubr.bf16.mxu0 0
      %592 = vmatmul.mubr.bf16.gmra.mrb[0].mxu0 %v480
      %v593 = vpop.f32.mrb[0].mxu0
      %v594 = vadd.f32 %v405, %v593
      %v595 = vpop.f32.mrb[0].mxu0
      %v596 = vadd.f32 %v405, %v595
      %v597 = vpop.f32.mrb[0].mxu0
      %v598 = vadd.f32 %v410, %v597
      %v599 = vpop.f32.mrb[0].mxu0
      %v600 = vadd.f32 %v410, %v599
      %601 = vdwg.mxu0
      %v602 = vmax.f32 %v524, 0.0
      %v603 = vmax.f32 %v526, 0.0
      %v604 = vmax.f32 %v528, 0.0
      %v605 = vmax.f32 %v530, 0.0
      %v606 = vmax.f32 %v534, 0.0
      %v607 = vmax.f32 %v536, 0.0
      %v608 = vmax.f32 %v538, 0.0
      %v609 = vmax.f32 %v540, 0.0
      %v610 = vmax.f32 %v544, 0.0
      %v611 = vmax.f32 %v546, 0.0
      %v612 = vmax.f32 %v548, 0.0
      %v613 = vmax.f32 %v550, 0.0
      %v614 = vmax.f32 %v554, 0.0
      %v615 = vmax.f32 %v556, 0.0
      %v616 = vmax.f32 %v558, 0.0
      %v617 = vmax.f32 %v560, 0.0
      %v618 = vmax.f32 %v564, 0.0
      %v619 = vmax.f32 %v566, 0.0
      %v620 = vmax.f32 %v568, 0.0
      %v621 = vmax.f32 %v570, 0.0
      %v622 = vmax.f32 %v574, 0.0
      %v623 = vmax.f32 %v576, 0.0
      %v624 = vmax.f32 %v578, 0.0
      %v625 = vmax.f32 %v580, 0.0
      %v626 = vmax.f32 %v584, 0.0
      %v627 = vmax.f32 %v586, 0.0
      %v628 = vmax.f32 %v588, 0.0
      %v629 = vmax.f32 %v590, 0.0
      %v630 = vmax.f32 %v594, 0.0
      %v631 = vmax.f32 %v596, 0.0
      %v632 = vmax.f32 %v598, 0.0
      %v633 = vmax.f32 %v600, 0.0
      %v634 = vpack.c.bf16 %v604, %v602
      %v635 = vpack.c.bf16 %v605, %v603
      %v636 = vpack.c.bf16 %v608, %v606
      %v637 = vpack.c.bf16 %v609, %v607
      %v638 = vpack.c.bf16 %v612, %v610
      %v639 = vpack.c.bf16 %v613, %v611
      %v640 = vpack.c.bf16 %v616, %v614
      %v641 = vpack.c.bf16 %v617, %v615
      %v642 = vpack.c.bf16 %v620, %v618
      %v643 = vpack.c.bf16 %v621, %v619
      %v644 = vpack.c.bf16 %v624, %v622
      %v645 = vpack.c.bf16 %v625, %v623
      %v646 = vpack.c.bf16 %v628, %v626
      %v647 = vpack.c.bf16 %v629, %v627
      %v648 = vpack.c.bf16 %v632, %v630
      %v649 = vpack.c.bf16 %v633, %v631
      %v650 = vld [vmem:[%s3] sm:$0xf]
      %v651 = vld [vmem:[%s3 + $0x4] sm:$0xf]
      %v652 = vld [vmem:[%s3 + $0x8] sm:$0xf]
      %v653 = vld [vmem:[%s3 + $0xc] sm:$0xf]
      %v654 = vld [vmem:[%s3 + $0x10] sm:$0xf]
      %v655 = vld [vmem:[%s3 + $0x14] sm:$0xf]
      %v656 = vld [vmem:[%s3 + $0x18] sm:$0xf]
      %v657 = vld [vmem:[%s3 + $0x1c] sm:$0xf]
      %v658 = vld [vmem:[%s3 + $0x20] sm:$0xf]
      %v659 = vld [vmem:[%s3 + $0x24] sm:$0xf]
      %v660 = vld [vmem:[%s3 + $0x28] sm:$0xf]
      %v661 = vld [vmem:[%s3 + $0x2c] sm:$0xf]
      %v662 = vld [vmem:[%s3 + $0x30] sm:$0xf]
      %v663 = vld [vmem:[%s3 + $0x34] sm:$0xf]
      %v664 = vld [vmem:[%s3 + $0x38] sm:$0xf]
      %v665 = vld [vmem:[%s3 + $0x3c] sm:$0xf]
      %v666 = vld [vmem:[%s4] sm:$0xff]
      %v667 = vld [vmem:[%s4 + $0x8] sm:$0xff]
      %v668 = vld [vmem:[%s4 + $0x10] sm:$0xff]
      %v669 = vld [vmem:[%s4 + $0x18] sm:$0xff]
      %v670 = vld [vmem:[%s4 + $0x20] sm:$0xff]
      %v671 = vld [vmem:[%s4 + $0x28] sm:$0xff]
      %v672 = vld [vmem:[%s4 + $0x30] sm:$0xff]
      %v673 = vld [vmem:[%s4 + $0x38] sm:$0xff]
      %v674 = vld [vmem:[%s4 + $0x40] sm:$0xff]
      %v675 = vld [vmem:[%s4 + $0x48] sm:$0xff]
      %v676 = vld [vmem:[%s4 + $0x50] sm:$0xff]
      %v677 = vld [vmem:[%s4 + $0x58] sm:$0xff]
      %v678 = vld [vmem:[%s4 + $0x60] sm:$0xff]
      %v679 = vld [vmem:[%s4 + $0x68] sm:$0xff]
      %v680 = vld [vmem:[%s4 + $0x70] sm:$0xff]
      %v681 = vld [vmem:[%s4 + $0x78] sm:$0xff]
      %683 = vset.pattern.permute.xlu0 0
      %684 = vperm.xlu0 %683, %v666
      %v685 = vpop.permute.xlu0 %684
      %688 = vset.pattern.permute.xlu0 0
      %689 = vperm.xlu0 %688, %v667
      %v690 = vpop.permute.xlu0 %689
      %693 = vset.pattern.permute.xlu0 0
      %694 = vperm.xlu0 %693, %v668
      %v695 = vpop.permute.xlu0 %694
      %698 = vset.pattern.permute.xlu0 0
      %699 = vperm.xlu0 %698, %v669
      %v700 = vpop.permute.xlu0 %699
      %703 = vset.pattern.permute.xlu0 0
      %704 = vperm.xlu0 %703, %v670
      %v705 = vpop.permute.xlu0 %704
      %708 = vset.pattern.permute.xlu0 0
      %709 = vperm.xlu0 %708, %v671
      %v710 = vpop.permute.xlu0 %709
      %713 = vset.pattern.permute.xlu0 0
      %714 = vperm.xlu0 %713, %v672
      %v715 = vpop.permute.xlu0 %714
      %718 = vset.pattern.permute.xlu0 0
      %719 = vperm.xlu0 %718, %v673
      %v720 = vpop.permute.xlu0 %719
      %723 = vset.pattern.permute.xlu0 0
      %724 = vperm.xlu0 %723, %v674
      %v725 = vpop.permute.xlu0 %724
      %728 = vset.pattern.permute.xlu0 0
      %729 = vperm.xlu0 %728, %v675
      %v730 = vpop.permute.xlu0 %729
      %733 = vset.pattern.permute.xlu0 0
      %734 = vperm.xlu0 %733, %v676
      %v735 = vpop.permute.xlu0 %734
      %738 = vset.pattern.permute.xlu0 0
      %739 = vperm.xlu0 %738, %v677
      %v740 = vpop.permute.xlu0 %739
      %743 = vset.pattern.permute.xlu0 0
      %744 = vperm.xlu0 %743, %v678
      %v745 = vpop.permute.xlu0 %744
      %748 = vset.pattern.permute.xlu0 0
      %749 = vperm.xlu0 %748, %v679
      %v750 = vpop.permute.xlu0 %749
      %753 = vset.pattern.permute.xlu0 0
      %754 = vperm.xlu0 %753, %v680
      %v755 = vpop.permute.xlu0 %754
      %758 = vset.pattern.permute.xlu0 0
      %759 = vperm.xlu0 %758, %v681
      %v760 = vpop.permute.xlu0 %759
      %v778 = vunpack.c.l.b16 %v650
      %v779 = vunpack.c.l.b16 %v651
      %v780 = vunpack.c.l.b16 %v652
      %v781 = vunpack.c.l.b16 %v653
      %v782 = vunpack.c.l.b16 %v654
      %v783 = vunpack.c.l.b16 %v655
      %v784 = vunpack.c.l.b16 %v656
      %v785 = vunpack.c.l.b16 %v657
      %v786 = vunpack.c.l.b16 %v658
      %v787 = vunpack.c.l.b16 %v659
      %v788 = vunpack.c.l.b16 %v660
      %v789 = vunpack.c.l.b16 %v661
      %v790 = vunpack.c.l.b16 %v662
      %v791 = vunpack.c.l.b16 %v663
      %v792 = vunpack.c.l.b16 %v664
      %v793 = vunpack.c.l.b16 %v665
      %v794 = vpack.c.b16 %v779, %v778
      %v795 = vpack.c.b16 %v781, %v780
      %v796 = vpack.c.b16 %v783, %v782
      %v797 = vpack.c.b16 %v785, %v784
      %v798 = vpack.c.b16 %v787, %v786
      %v799 = vpack.c.b16 %v789, %v788
      %v800 = vpack.c.b16 %v791, %v790
      %v801 = vpack.c.b16 %v793, %v792
      %810 = vmatprep.subr.bf16.mxu0 %v635
      %811 = vmatpush1.bf16.msra.mxu0 %v634
      %812 = vmatprep.subr.bf16.mxu0 %v637
      %813 = vmatpush1.bf16.msra.mxu0 %v636
      %814 = vmatprep.subr.bf16.mxu0 %v639
      %815 = vmatpush1.bf16.msra.mxu0 %v638
      %816 = vmatprep.subr.bf16.mxu0 %v641
      %817 = vmatpush1.bf16.msra.mxu0 %v640
      %818 = vmatprep.subr.bf16.mxu0 %v643
      %819 = vmatpush1.bf16.msra.mxu0 %v642
      %820 = vmatprep.subr.bf16.mxu0 %v645
      %821 = vmatpush1.bf16.msra.mxu0 %v644
      %822 = vmatprep.subr.bf16.mxu0 %v647
      %823 = vmatpush1.bf16.msra.mxu0 %v646
      %824 = vmatprep.subr.bf16.mxu0 %v649
      %825 = vmatpush1.bf16.msra.mxu0 %v648
      %826 = vmatprep.subr.bf16.mxu0 0
      %827 = vmatpush1.bf16.msra.mxu0 0
      %828 = vmatprep.subr.bf16.mxu0 0
      %829 = vmatpush1.bf16.msra.mxu0 0
      %830 = vmatprep.subr.bf16.mxu0 0
      %831 = vmatpush1.bf16.msra.mxu0 0
      %832 = vmatprep.subr.bf16.mxu0 0
      %833 = vmatpush1.bf16.msra.mxu0 0
      %834 = vmatprep.subr.bf16.mxu0 0
      %835 = vmatpush1.bf16.msra.mxu0 0
      %836 = vmatprep.subr.bf16.mxu0 0
      %837 = vmatpush1.bf16.msra.mxu0 0
      %838 = vmatprep.subr.bf16.mxu0 0
      %839 = vmatpush1.bf16.msra.mxu0 0
      %840 = vmatprep.subr.bf16.mxu0 0
      %841 = vmatpush1.bf16.msra.mxu0 0
      %842 = vmatprep.mubr.bf16.mxu0 0
      %843 = vmatmul.mubr.bf16.gmra.mrb[0].mxu0 %v794
      %v844 = vpop.f32.mrb[0].mxu0
      %v845 = vadd.f32 %v685, %v844
      %v846 = vpop.f32.mrb[0].mxu0
      %v847 = vadd.f32 %v685, %v846
      %v848 = vpop.f32.mrb[0].mxu0
      %v849 = vadd.f32 %v690, %v848
      %v850 = vpop.f32.mrb[0].mxu0
      %v851 = vadd.f32 %v690, %v850
      %852 = vmatprep.mubr.bf16.mxu0 0
      %853 = vmatmul.mubr.bf16.gmra.mrb[0].mxu0 %v795
      %v854 = vpop.f32.mrb[0].mxu0
      %v855 = vadd.f32 %v695, %v854
      %v856 = vpop.f32.mrb[0].mxu0
      %v857 = vadd.f32 %v695, %v856
      %v858 = vpop.f32.mrb[0].mxu0
      %v859 = vadd.f32 %v700, %v858
      %v860 = vpop.f32.mrb[0].mxu0
      %v861 = vadd.f32 %v700, %v860
      %862 = vmatprep.mubr.bf16.mxu0 0
      %863 = vmatmul.mubr.bf16.gmra.mrb[0].mxu0 %v796
      %v864 = vpop.f32.mrb[0].mxu0
      %v865 = vadd.f32 %v705, %v864
      %v866 = vpop.f32.mrb[0].mxu0
      %v867 = vadd.f32 %v705, %v866
      %v868 = vpop.f32.mrb[0].mxu0
      %v869 = vadd.f32 %v710, %v868
      %v870 = vpop.f32.mrb[0].mxu0
      %v871 = vadd.f32 %v710, %v870
      %872 = vmatprep.mubr.bf16.mxu0 0
      %873 = vmatmul.mubr.bf16.gmra.mrb[0].mxu0 %v797
      %v874 = vpop.f32.mrb[0].mxu0
      %v875 = vadd.f32 %v715, %v874
      %v876 = vpop.f32.mrb[0].mxu0
      %v877 = vadd.f32 %v715, %v876
      %v878 = vpop.f32.mrb[0].mxu0
      %v879 = vadd.f32 %v720, %v878
      %v880 = vpop.f32.mrb[0].mxu0
      %v881 = vadd.f32 %v720, %v880
      %882 = vmatprep.mubr.bf16.mxu0 0
      %883 = vmatmul.mubr.bf16.gmra.mrb[0].mxu0 %v798
      %v884 = vpop.f32.mrb[0].mxu0
      %v885 = vadd.f32 %v725, %v884
      %v886 = vpop.f32.mrb[0].mxu0
      %v887 = vadd.f32 %v725, %v886
      %v888 = vpop.f32.mrb[0].mxu0
      %v889 = vadd.f32 %v730, %v888
      %v890 = vpop.f32.mrb[0].mxu0
      %v891 = vadd.f32 %v730, %v890
      %892 = vmatprep.mubr.bf16.mxu0 0
      %893 = vmatmul.mubr.bf16.gmra.mrb[0].mxu0 %v799
      %v894 = vpop.f32.mrb[0].mxu0
      %v895 = vadd.f32 %v735, %v894
      %v896 = vpop.f32.mrb[0].mxu0
      %v897 = vadd.f32 %v735, %v896
      %v898 = vpop.f32.mrb[0].mxu0
      %v899 = vadd.f32 %v740, %v898
      %v900 = vpop.f32.mrb[0].mxu0
      %v901 = vadd.f32 %v740, %v900
      %902 = vmatprep.mubr.bf16.mxu0 0
      %903 = vmatmul.mubr.bf16.gmra.mrb[0].mxu0 %v800
      %v904 = vpop.f32.mrb[0].mxu0
      %v905 = vadd.f32 %v745, %v904
      %v906 = vpop.f32.mrb[0].mxu0
      %v907 = vadd.f32 %v745, %v906
      %v908 = vpop.f32.mrb[0].mxu0
      %v909 = vadd.f32 %v750, %v908
      %v910 = vpop.f32.mrb[0].mxu0
      %v911 = vadd.f32 %v750, %v910
      %912 = vmatprep.mubr.bf16.mxu0 0
      %913 = vmatmul.mubr.bf16.gmra.mrb[0].mxu0 %v801
      %v914 = vpop.f32.mrb[0].mxu0
      %v915 = vadd.f32 %v755, %v914
      %v916 = vpop.f32.mrb[0].mxu0
      %v917 = vadd.f32 %v755, %v916
      %v918 = vpop.f32.mrb[0].mxu0
      %v919 = vadd.f32 %v760, %v918
      %v920 = vpop.f32.mrb[0].mxu0
      %v921 = vadd.f32 %v760, %v920
      %922 = vdwg.mxu0
      %v923 = vmax.f32 %v845, 0.0
      %v924 = vmax.f32 %v847, 0.0
      %v925 = vmax.f32 %v849, 0.0
      %v926 = vmax.f32 %v851, 0.0
      %v927 = vmax.f32 %v855, 0.0
      %v928 = vmax.f32 %v857, 0.0
      %v929 = vmax.f32 %v859, 0.0
      %v930 = vmax.f32 %v861, 0.0
      %v931 = vmax.f32 %v865, 0.0
      %v932 = vmax.f32 %v867, 0.0
      %v933 = vmax.f32 %v869, 0.0
      %v934 = vmax.f32 %v871, 0.0
      %v935 = vmax.f32 %v875, 0.0
      %v936 = vmax.f32 %v877, 0.0
      %v937 = vmax.f32 %v879, 0.0
      %v938 = vmax.f32 %v881, 0.0
      %v939 = vmax.f32 %v885, 0.0
      %v940 = vmax.f32 %v887, 0.0
      %v941 = vmax.f32 %v889, 0.0
      %v942 = vmax.f32 %v891, 0.0
      %v943 = vmax.f32 %v895, 0.0
      %v944 = vmax.f32 %v897, 0.0
      %v945 = vmax.f32 %v899, 0.0
      %v946 = vmax.f32 %v901, 0.0
      %v947 = vmax.f32 %v905, 0.0
      %v948 = vmax.f32 %v907, 0.0
      %v949 = vmax.f32 %v909, 0.0
      %v950 = vmax.f32 %v911, 0.0
      %v951 = vmax.f32 %v915, 0.0
      %v952 = vmax.f32 %v917, 0.0
      %v953 = vmax.f32 %v919, 0.0
      %v954 = vmax.f32 %v921, 0.0
      %s955 = sadd.s32 %s21, %s23
      %s956 = sadd.s32 %s955, 1
      %s957 = smul.u32 %s956, 256
      %p958 = scmp.gt.s32.totalorder %s957, 200
      // Predicated region
      $region45: #{tpu_custom_call.1} parent=39 // pred_check
        %p959 = pneg %p958
      $region46: #{tpu_custom_call.1} parent=39 // pred_check_branch
        %961 = sbr.rel (%p959) target = $region48
      $region47: #{tpu_custom_call.1} parent=39 // pred_region
        %s962 = smul.u32 %s955, 256
        %v963 = vlaneseq
        %v964 = vand.u32 %v963, 127
        %v965 = vadd.s32 %v964, 128
        %v966 = vstv %s962
        %v967 = vadd.s32 %v966, %v964
        %v968 = vadd.s32 %v966, %v965
        %vm969 = vcmp.lt.s32.totalorder %v967, 200
        %vm970 = vcmp.lt.s32.totalorder %v968, 200
        %v971 = vsel %vm969, %v923, 0.0
        %v972 = vsel %vm970, %v924, 0.0
        %v973 = vsel %vm969, %v925, 0.0
        %v974 = vsel %vm970, %v926, 0.0
        %v975 = vsel %vm969, %v927, 0.0
        %v976 = vsel %vm970, %v928, 0.0
        %v977 = vsel %vm969, %v929, 0.0
        %v978 = vsel %vm970, %v930, 0.0
        %v979 = vsel %vm969, %v931, 0.0
        %v980 = vsel %vm970, %v932, 0.0
        %v981 = vsel %vm969, %v933, 0.0
        %v982 = vsel %vm970, %v934, 0.0
        %v983 = vsel %vm969, %v935, 0.0
        %v984 = vsel %vm970, %v936, 0.0
        %v985 = vsel %vm969, %v937, 0.0
        %v986 = vsel %vm970, %v938, 0.0
        %v987 = vsel %vm969, %v939, 0.0
        %v988 = vsel %vm970, %v940, 0.0
        %v989 = vsel %vm969, %v941, 0.0
        %v990 = vsel %vm970, %v942, 0.0
        %v991 = vsel %vm969, %v943, 0.0
        %v992 = vsel %vm970, %v944, 0.0
        %v993 = vsel %vm969, %v945, 0.0
        %v994 = vsel %vm970, %v946, 0.0
        %v995 = vsel %vm969, %v947, 0.0
        %v996 = vsel %vm970, %v948, 0.0
        %v997 = vsel %vm969, %v949, 0.0
        %v998 = vsel %vm970, %v950, 0.0
        %v999 = vsel %vm969, %v951, 0.0
        %v1000 = vsel %vm970, %v952, 0.0
        %v1001 = vsel %vm969, %v953, 0.0
        %v1002 = vsel %vm970, %v954, 0.0
        %v1003 = vld [vmem:[%s276] sm:$0xff]
        %v1004 = vld [vmem:[%s276 + $0x8] sm:$0xff]
        %v1005 = vld [vmem:[%s276 + $0x10] sm:$0xff]
        %v1006 = vld [vmem:[%s276 + $0x18] sm:$0xff]
        %v1007 = vld [vmem:[%s276 + $0x20] sm:$0xff]
        %v1008 = vld [vmem:[%s276 + $0x28] sm:$0xff]
        %v1009 = vld [vmem:[%s276 + $0x30] sm:$0xff]
        %v1010 = vld [vmem:[%s276 + $0x38] sm:$0xff]
        %v1011 = vld [vmem:[%s276 + $0x40] sm:$0xff]
        %v1012 = vld [vmem:[%s276 + $0x48] sm:$0xff]
        %v1013 = vld [vmem:[%s276 + $0x50] sm:$0xff]
        %v1014 = vld [vmem:[%s276 + $0x58] sm:$0xff]
        %v1015 = vld [vmem:[%s276 + $0x60] sm:$0xff]
        %v1016 = vld [vmem:[%s276 + $0x68] sm:$0xff]
        %v1017 = vld [vmem:[%s276 + $0x70] sm:$0xff]
        %v1018 = vld [vmem:[%s276 + $0x78] sm:$0xff]
        %v1019 = vmax.f32 %v971, %v972
        %1020 = vmax.xlane.f32.xlu0 %v1019
        %v1021 = vpop.xlane.xlu0 %1020
        %v1022 = vmax.f32 %v973, %v974
        %1023 = vmax.xlane.f32.xlu0 %v1022
        %v1024 = vpop.xlane.xlu0 %1023
        %v1025 = vmax.f32 %v975, %v976
        %1026 = vmax.xlane.f32.xlu0 %v1025
        %v1027 = vpop.xlane.xlu0 %1026
        %v1028 = vmax.f32 %v977, %v978
        %1029 = vmax.xlane.f32.xlu0 %v1028
        %v1030 = vpop.xlane.xlu0 %1029
        %v1031 = vmax.f32 %v979, %v980
        %1032 = vmax.xlane.f32.xlu0 %v1031
        %v1033 = vpop.xlane.xlu0 %1032
        %v1034 = vmax.f32 %v981, %v982
        %1035 = vmax.xlane.f32.xlu0 %v1034
        %v1036 = vpop.xlane.xlu0 %1035
        %v1037 = vmax.f32 %v983, %v984
        %1038 = vmax.xlane.f32.xlu0 %v1037
        %v1039 = vpop.xlane.xlu0 %1038
        %v1040 = vmax.f32 %v985, %v986
        %1041 = vmax.xlane.f32.xlu0 %v1040
        %v1042 = vpop.xlane.xlu0 %1041
        %v1043 = vmax.f32 %v987, %v988
        %1044 = vmax.xlane.f32.xlu0 %v1043
        %v1045 = vpop.xlane.xlu0 %1044
        %v1046 = vmax.f32 %v989, %v990
        %1047 = vmax.xlane.f32.xlu0 %v1046
        %v1048 = vpop.xlane.xlu0 %1047
        %v1049 = vmax.f32 %v991, %v992
        %1050 = vmax.xlane.f32.xlu0 %v1049
        %v1051 = vpop.xlane.xlu0 %1050
        %v1052 = vmax.f32 %v993, %v994
        %1053 = vmax.xlane.f32.xlu0 %v1052
        %v1054 = vpop.xlane.xlu0 %1053
        %v1055 = vmax.f32 %v995, %v996
        %1056 = vmax.xlane.f32.xlu0 %v1055
        %v1057 = vpop.xlane.xlu0 %1056
        %v1058 = vmax.f32 %v997, %v998
        %1059 = vmax.xlane.f32.xlu0 %v1058
        %v1060 = vpop.xlane.xlu0 %1059
        %v1061 = vmax.f32 %v999, %v1000
        %1062 = vmax.xlane.f32.xlu0 %v1061
        %v1063 = vpop.xlane.xlu0 %1062
        %v1064 = vmax.f32 %v1001, %v1002
        %1065 = vmax.xlane.f32.xlu0 %v1064
        %v1066 = vpop.xlane.xlu0 %1065
        %v1067 = vmax.f32 %v1003, %v1021
        %v1068 = vmax.f32 %v1004, %v1024
        %v1069 = vmax.f32 %v1005, %v1027
        %v1070 = vmax.f32 %v1006, %v1030
        %v1071 = vmax.f32 %v1007, %v1033
        %v1072 = vmax.f32 %v1008, %v1036
        %v1073 = vmax.f32 %v1009, %v1039
        %v1074 = vmax.f32 %v1010, %v1042
        %v1075 = vmax.f32 %v1011, %v1045
        %v1076 = vmax.f32 %v1012, %v1048
        %v1077 = vmax.f32 %v1013, %v1051
        %v1078 = vmax.f32 %v1014, %v1054
        %v1079 = vmax.f32 %v1015, %v1057
        %v1080 = vmax.f32 %v1016, %v1060
        %v1081 = vmax.f32 %v1017, %v1063
        %v1082 = vmax.f32 %v1018, %v1066
        %vm1083 = vcmask 7168
        %1084 = vst.msk [vmem:[%s276] sm:$0xff] %vm1083, %v1067
        %1085 = vst.msk [vmem:[%s276 + $0x8] sm:$0xff] %vm1083, %v1068
        %1086 = vst.msk [vmem:[%s276 + $0x10] sm:$0xff] %vm1083, %v1069
        %1087 = vst.msk [vmem:[%s276 + $0x18] sm:$0xff] %vm1083, %v1070
        %1088 = vst.msk [vmem:[%s276 + $0x20] sm:$0xff] %vm1083, %v1071
        %1089 = vst.msk [vmem:[%s276 + $0x28] sm:$0xff] %vm1083, %v1072
        %1090 = vst.msk [vmem:[%s276 + $0x30] sm:$0xff] %vm1083, %v1073
        %1091 = vst.msk [vmem:[%s276 + $0x38] sm:$0xff] %vm1083, %v1074
        %1092 = vst.msk [vmem:[%s276 + $0x40] sm:$0xff] %vm1083, %v1075
        %1093 = vst.msk [vmem:[%s276 + $0x48] sm:$0xff] %vm1083, %v1076
        %1094 = vst.msk [vmem:[%s276 + $0x50] sm:$0xff] %vm1083, %v1077
        %1095 = vst.msk [vmem:[%s276 + $0x58] sm:$0xff] %vm1083, %v1078
        %1096 = vst.msk [vmem:[%s276 + $0x60] sm:$0xff] %vm1083, %v1079
        %1097 = vst.msk [vmem:[%s276 + $0x68] sm:$0xff] %vm1083, %v1080
        %1098 = vst.msk [vmem:[%s276 + $0x70] sm:$0xff] %vm1083, %v1081
        %1099 = vst.msk [vmem:[%s276 + $0x78] sm:$0xff] %vm1083, %v1082
      $region48: #{tpu_custom_call.1} parent=39 // pred_fallthru
        _
      %p1100 = scmp.le.s32.totalorder %s957, 200
      // Predicated region
      $region49: #{tpu_custom_call.1} parent=39 // pred_check
        %p1101 = pneg %p1100
      $region50: #{tpu_custom_call.1} parent=39 // pred_check_branch
        %1103 = sbr.rel (%p1101) target = $region52
      $region51: #{tpu_custom_call.1} parent=39 // pred_region
        %v1104 = vld [vmem:[%s276] sm:$0xff]
        %v1105 = vld [vmem:[%s276 + $0x8] sm:$0xff]
        %v1106 = vld [vmem:[%s276 + $0x10] sm:$0xff]
        %v1107 = vld [vmem:[%s276 + $0x18] sm:$0xff]
        %v1108 = vld [vmem:[%s276 + $0x20] sm:$0xff]
        %v1109 = vld [vmem:[%s276 + $0x28] sm:$0xff]
        %v1110 = vld [vmem:[%s276 + $0x30] sm:$0xff]
        %v1111 = vld [vmem:[%s276 + $0x38] sm:$0xff]
        %v1112 = vld [vmem:[%s276 + $0x40] sm:$0xff]
        %v1113 = vld [vmem:[%s276 + $0x48] sm:$0xff]
        %v1114 = vld [vmem:[%s276 + $0x50] sm:$0xff]
        %v1115 = vld [vmem:[%s276 + $0x58] sm:$0xff]
        %v1116 = vld [vmem:[%s276 + $0x60] sm:$0xff]
        %v1117 = vld [vmem:[%s276 + $0x68] sm:$0xff]
        %v1118 = vld [vmem:[%s276 + $0x70] sm:$0xff]
        %v1119 = vld [vmem:[%s276 + $0x78] sm:$0xff]
        %v1120 = vmax.f32 %v923, %v924
        %1121 = vmax.xlane.f32.xlu0 %v1120
        %v1122 = vpop.xlane.xlu0 %1121
        %v1123 = vmax.f32 %v925, %v926
        %1124 = vmax.xlane.f32.xlu0 %v1123
        %v1125 = vpop.xlane.xlu0 %1124
        %v1126 = vmax.f32 %v927, %v928
        %1127 = vmax.xlane.f32.xlu0 %v1126
        %v1128 = vpop.xlane.xlu0 %1127
        %v1129 = vmax.f32 %v929, %v930
        %1130 = vmax.xlane.f32.xlu0 %v1129
        %v1131 = vpop.xlane.xlu0 %1130
        %v1132 = vmax.f32 %v931, %v932
        %1133 = vmax.xlane.f32.xlu0 %v1132
        %v1134 = vpop.xlane.xlu0 %1133
        %v1135 = vmax.f32 %v933, %v934
        %1136 = vmax.xlane.f32.xlu0 %v1135
        %v1137 = vpop.xlane.xlu0 %1136
        %v1138 = vmax.f32 %v935, %v936
        %1139 = vmax.xlane.f32.xlu0 %v1138
        %v1140 = vpop.xlane.xlu0 %1139
        %v1141 = vmax.f32 %v937, %v938
        %1142 = vmax.xlane.f32.xlu0 %v1141
        %v1143 = vpop.xlane.xlu0 %1142
        %v1144 = vmax.f32 %v939, %v940
        %1145 = vmax.xlane.f32.xlu0 %v1144
        %v1146 = vpop.xlane.xlu0 %1145
        %v1147 = vmax.f32 %v941, %v942
        %1148 = vmax.xlane.f32.xlu0 %v1147
        %v1149 = vpop.xlane.xlu0 %1148
        %v1150 = vmax.f32 %v943, %v944
        %1151 = vmax.xlane.f32.xlu0 %v1150
        %v1152 = vpop.xlane.xlu0 %1151
        %v1153 = vmax.f32 %v945, %v946
        %1154 = vmax.xlane.f32.xlu0 %v1153
        %v1155 = vpop.xlane.xlu0 %1154
        %v1156 = vmax.f32 %v947, %v948
        %1157 = vmax.xlane.f32.xlu0 %v1156
        %v1158 = vpop.xlane.xlu0 %1157
        %v1159 = vmax.f32 %v949, %v950
        %1160 = vmax.xlane.f32.xlu0 %v1159
        %v1161 = vpop.xlane.xlu0 %1160
        %v1162 = vmax.f32 %v951, %v952
        %1163 = vmax.xlane.f32.xlu0 %v1162
        %v1164 = vpop.xlane.xlu0 %1163
        %v1165 = vmax.f32 %v953, %v954
        %1166 = vmax.xlane.f32.xlu0 %v1165
        %v1167 = vpop.xlane.xlu0 %1166
        %v1168 = vmax.f32 %v1104, %v1122
        %v1169 = vmax.f32 %v1105, %v1125
        %v1170 = vmax.f32 %v1106, %v1128
        %v1171 = vmax.f32 %v1107, %v1131
        %v1172 = vmax.f32 %v1108, %v1134
        %v1173 = vmax.f32 %v1109, %v1137
        %v1174 = vmax.f32 %v1110, %v1140
        %v1175 = vmax.f32 %v1111, %v1143
        %v1176 = vmax.f32 %v1112, %v1146
        %v1177 = vmax.f32 %v1113, %v1149
        %v1178 = vmax.f32 %v1114, %v1152
        %v1179 = vmax.f32 %v1115, %v1155
        %v1180 = vmax.f32 %v1116, %v1158
        %v1181 = vmax.f32 %v1117, %v1161
        %v1182 = vmax.f32 %v1118, %v1164
        %v1183 = vmax.f32 %v1119, %v1167
        %vm1184 = vcmask 7168
        %1185 = vst.msk [vmem:[%s276] sm:$0xff] %vm1184, %v1168
        %1186 = vst.msk [vmem:[%s276 + $0x8] sm:$0xff] %vm1184, %v1169
        %1187 = vst.msk [vmem:[%s276 + $0x10] sm:$0xff] %vm1184, %v1170
        %1188 = vst.msk [vmem:[%s276 + $0x18] sm:$0xff] %vm1184, %v1171
        %1189 = vst.msk [vmem:[%s276 + $0x20] sm:$0xff] %vm1184, %v1172
        %1190 = vst.msk [vmem:[%s276 + $0x28] sm:$0xff] %vm1184, %v1173
        %1191 = vst.msk [vmem:[%s276 + $0x30] sm:$0xff] %vm1184, %v1174
        %1192 = vst.msk [vmem:[%s276 + $0x38] sm:$0xff] %vm1184, %v1175
        %1193 = vst.msk [vmem:[%s276 + $0x40] sm:$0xff] %vm1184, %v1176
        %1194 = vst.msk [vmem:[%s276 + $0x48] sm:$0xff] %vm1184, %v1177
        %1195 = vst.msk [vmem:[%s276 + $0x50] sm:$0xff] %vm1184, %v1178
        %1196 = vst.msk [vmem:[%s276 + $0x58] sm:$0xff] %vm1184, %v1179
        %1197 = vst.msk [vmem:[%s276 + $0x60] sm:$0xff] %vm1184, %v1180
        %1198 = vst.msk [vmem:[%s276 + $0x68] sm:$0xff] %vm1184, %v1181
        %1199 = vst.msk [vmem:[%s276 + $0x70] sm:$0xff] %vm1184, %v1182
        %1200 = vst.msk [vmem:[%s276 + $0x78] sm:$0xff] %vm1184, %v1183
      $region52: #{tpu_custom_call.1} parent=39 // pred_fallthru
        _
      %p1201 = scmp.lt.s32.totalorder %s21, 0
      %s1202 = scalar_select %p1201, %s21, 0
      %p1203 = scmp.lt.s32.totalorder %s22, 1
      %s1204 = scalar_select %p1203, %s22, 1
      %s1205 = smul.addr %s1204, 16
      %s1206 = smul.addr %s1202, 32
      %s1207 = sadd.s32 %s1205, %s1206
      %s1208 = smul.addr %s1207, 8
      %s1209 = scalar_lea.vmem %s5, %s1208
      // Predicated region
      $region53: #{tpu_custom_call.1} parent=39 // pred_check
        %p1210 = pneg %p169
      $region54: #{tpu_custom_call.1} parent=39 // pred_check_branch
        %1212 = sbr.rel (%p1210) target = $region56
      $region55: #{tpu_custom_call.1} parent=39 // pred_region
        _
      $region56: #{tpu_custom_call.1} parent=39 // pred_fallthru
        _
    $region40: #{tpu_custom_call.1} parent=5 // pred_fallthru
      _
    %p1213 = scmp.le.s32.totalorder 2, %s11
    // Predicated region
    $region57: #{tpu_custom_call.1} parent=5 // pred_check
      %p1214 = pneg %p1213
    $region58: #{tpu_custom_call.1} parent=5 // pred_check_branch
      %1216 = sbr.rel (%p1214) target = $region60
    $region59: #{tpu_custom_call.1} parent=5 // pred_region
      %s1217 = ssub.s32 %s11, 2
      // Predicated region
      $region61: #{tpu_custom_call.1} parent=59 // pred_check
        %p1218 = pneg %p175
      $region62: #{tpu_custom_call.1} parent=59 // pred_check_branch
        %1220 = sbr.rel (%p1218) target = $region64
      $region63: #{tpu_custom_call.1} parent=59 // pred_region
        %p1221 = scmp.lt.s32.totalorder %s24, 0
        %s1222 = scalar_select %p1221, %s24, 0
        %p1223 = scmp.lt.s32.totalorder %s25, 1
        %s1224 = scalar_select %p1223, %s25, 1
        %s1225 = smul.addr %s1224, 16
        %s1226 = smul.addr %s1222, 32
        %s1227 = sadd.s32 %s1225, %s1226
        %s1228 = smul.addr %s1227, 8
        %s1229 = scalar_lea.vmem %s5, %s1228
      $region64: #{tpu_custom_call.1} parent=59 // pred_fallthru
        _
    $region60: #{tpu_custom_call.1} parent=5 // pred_fallthru
      _
  $region6: #{tpu_custom_call.1} parent=0 // loop_footer
    %s15 = sadd.s32 1, %s11
  $region7: #{tpu_custom_call.1} parent=0 // loop_footer_branch
    %10 = sbr.rel target = $region3
  $region8: #{tpu_custom_call.1} parent=0 // loop_exit
    _

</llo_original>
